<compile_context>
chip_gen: v7x
topology: tpu7x:2x2x1
jax: 0.10.0
libtpu: 0.0.40
codegen_flags: <defaults>
</compile_context>

<pallas_src>
import numpy as np
import jax
import jax.numpy as jnp
from jax.experimental import pallas as pl
from jax.experimental.pallas import tpu as pltpu


def _round_up(x: int, mult: int) -> int:
    return ((x + mult - 1) // mult) * mult


def _gaussian_expansion_kernel(width_ref, bond_ref, centers_ref, out_ref):
    # width_ref:   [1]          f32  (SMEM, scalar-prefetch)
    # bond_ref:    [1, TILE_N]  f32  (edges lane-dense)
    # centers_ref: [M, 1]       f32  (centers on the sublane axis)
    # out_ref:     [M, TILE_N]  f32
    w = width_ref[0]
    d = bond_ref[...]                      # [1, TILE_N]
    c = centers_ref[...]                   # [M, 1]
    diff = d - c                           # broadcast -> [M, TILE_N]
    out_ref[...] = jnp.exp(-w * diff * diff)


def gaussian_expansion(bond_dists, centers, width, *, max_tile_n: int = 8192):
    """bond_dists: [N, 1] (or [N]) f32, centers: [M] f32 -> [N, M] f32."""
    bond_flat = jnp.asarray(bond_dists, jnp.float32).reshape(-1)      # [N]
    centers_col = jnp.asarray(centers, jnp.float32).reshape(-1, 1)    # [M, 1]
    n = bond_flat.shape[0]
    m = centers_col.shape[0]

    # Lane-dense tiling over the edge dimension (multiples of 128 lanes).
    # (20, 8192) f32 tile ~= 640 KiB -> double-buffered in/out stays well under
    # the 32 MiB scoped VMEM default on all of v5e/v6e/v7x.
    n_pad = _round_up(max(n, 1), 128)
    tile_n = _round_up(min(int(max_tile_n), n_pad), 128)
    n_pad = _round_up(n_pad, tile_n)
    if n_pad != n:
        bond_flat = jnp.pad(bond_flat, (0, n_pad - n))
    bond_row = bond_flat.reshape(1, n_pad)                            # [1, N_pad]

    width_arr = jnp.asarray(width, jnp.float32).reshape(1)            # runtime scalar

    grid = (n_pad // tile_n,)

    out_mn = pl.pallas_call(
        _gaussian_expansion_kernel,
        out_shape=jax.ShapeDtypeStruct((m, n_pad), jnp.float32),
        grid_spec=pltpu.PrefetchScalarGridSpec(
            num_scalar_prefetch=1,                      # width -> SMEM
            grid=grid,
            in_specs=[
                # bond distances: one lane-dense [1, TILE_N] slab per tile
                pl.BlockSpec((1, tile_n), lambda i, w_ref: (0, i)),
                # centers: tiny [M, 1] column, resident for every tile
                pl.BlockSpec((m, 1), lambda i, w_ref: (0, 0)),
            ],
            out_specs=pl.BlockSpec((m, tile_n), lambda i, w_ref: (0, i)),
        ),
        compiler_params=pltpu.CompilerParams(
            # independent tiles -> shard across both TensorCores on v7x
            dimension_semantics=("parallel",),
        ),
        cost_estimate=pl.CostEstimate(
            flops=3 * m * n_pad,
            transcendentals=m * n_pad,
            bytes_accessed=4 * (n_pad + m + m * n_pad),
        ),
    )(width_arr, bond_row, centers_col)

    # Back to the torch layout [N, M]; drop the lane padding.
    # TODO(synk): if the downstream consumer tolerates bf16, narrow the store
    # dtype to halve HBM write traffic; kept f32 to match torch semantics.
    return out_mn[:, :n].T


class GaussianExpansionPallas:
    """Mirrors the PyTorch module's __init__ parameterization."""

    def __init__(self, initial: float = 0.0, final: float = 4.0,
                 num_centers: int = 20, width=0.5):
        centers_np = np.linspace(initial, final, num_centers).astype(np.float32)
        self.centers = jnp.asarray(centers_np)
        if width is None:
            self.width = float(1.0 / np.diff(centers_np).mean())
        else:
            self.width = float(width)

    def __call__(self, bond_dists):
        # bond_dists expected as [N, 1] (same broadcasting the torch code relies on)
        return gaussian_expansion(bond_dists, self.centers, self.width)


if __name__ == "__main__":
    key = jax.random.PRNGKey(0)
    n_edges = 64
    # deterministic synthetic bond distances in [0, 4)
    bond_dists = jax.random.uniform(key, (n_edges, 1), dtype=jnp.float32,
                                    minval=0.0, maxval=4.0)

    module = GaussianExpansionPallas(initial=0.0, final=4.0,
                                     num_centers=20, width=0.5)
    out = jax.block_until_ready(module(bond_dists))

    # reference in plain JAX
    ref = jnp.exp(-module.width * (bond_dists - module.centers[None, :]) ** 2)
    assert out.shape == (n_edges, 20)
    np.testing.assert_allclose(np.asarray(out), np.asarray(ref),
                               rtol=1e-6, atol=1e-6)

    # exercise the multi-tile + padding path with a small tile size
    key2 = jax.random.PRNGKey(1)
    n2 = 300
    bd2 = jax.random.uniform(key2, (n2, 1), dtype=jnp.float32,
                             minval=0.0, maxval=4.0)
    out2 = jax.block_until_ready(
        gaussian_expansion(bd2, module.centers, module.width, max_tile_n=128))
    ref2 = jnp.exp(-module.width * (bd2 - module.centers[None, :]) ** 2)
    assert out2.shape == (n2, 20)
    np.testing.assert_allclose(np.asarray(out2), np.asarray(ref2),
                               rtol=1e-6, atol=1e-6)

    print("KERNEL_OK")
</pallas_src>

<mosaic_0001>
module attributes {stable_mosaic.version = 11 : i64} {
  func.func @_gaussian_expansion_kernel(%arg0: i32, %arg1: memref<1xf32, #tpu.memory_space<smem>>, %arg2: memref<1x128xf32, #tpu.memory_space<vmem>>, %arg3: memref<20x1xf32, #tpu.memory_space<vmem>>, %arg4: memref<20x128xf32, #tpu.memory_space<vmem>>) attributes {dimension_semantics = [#tpu.dimension_semantics<parallel>], iteration_bounds = array<i64: 1>, scalar_prefetch = 1 : i64, scratch_operands = 0 : i64, tpu.core_type = #tpu.core_type<tc>, window_params = [{transform_indices = @transform_0, window_bounds = array<i64: 1, 128>}, {pipeline_mode = #tpu.pipeline_mode<synchronous>, transform_indices = @transform_1, window_bounds = array<i64: 20, 1>}, {transform_indices = @transform_2, window_bounds = array<i64: 20, 128>}]} {
    %c0 = arith.constant 0 : index
    %0 = memref.load %arg1[%c0] : memref<1xf32, #tpu.memory_space<smem>>
    %c0_0 = arith.constant 0 : index
    %c0_1 = arith.constant 0 : index
    %1 = vector.load %arg2[%c0_0, %c0_1] : memref<1x128xf32, #tpu.memory_space<vmem>>, vector<1x128xf32>
    %c0_2 = arith.constant 0 : index
    %c0_3 = arith.constant 0 : index
    %2 = vector.load %arg3[%c0_2, %c0_3] : memref<20x1xf32, #tpu.memory_space<vmem>>, vector<20x1xf32>
    %3 = vector.broadcast %1 : vector<1x128xf32> to vector<20x128xf32>
    %4 = vector.broadcast %2 : vector<20x1xf32> to vector<20x128xf32>
    %5 = arith.subf %3, %4 : vector<20x128xf32>
    %cst = arith.constant 0.000000e+00 : f32
    %6 = arith.subf %cst, %0 : f32
    %7 = vector.broadcast %6 : f32 to vector<20x128xf32>
    %8 = arith.mulf %7, %5 : vector<20x128xf32>
    %9 = arith.mulf %8, %5 : vector<20x128xf32>
    %10 = math.exp %9 : vector<20x128xf32>
    %c0_4 = arith.constant 0 : index
    %c0_5 = arith.constant 0 : index
    %11 = vector.load %arg4[%c0_4, %c0_5] : memref<20x128xf32, #tpu.memory_space<vmem>>, vector<20x128xf32>
    tpu.vector_store %arg4[%c0_4, %c0_5], %10 {strides = array<i32>} : memref<20x128xf32, #tpu.memory_space<vmem>>, vector<20x128xf32>,
    return
  }
  func.func @transform_0(%arg0: i32, %arg1: memref<1xf32, #tpu.memory_space<smem>>) -> (i32, i32) {
    %c0_i32 = arith.constant 0 : i32
    %c0_i32_0 = arith.constant 0 : i32
    return %c0_i32, %arg0 : i32, i32
  }
  func.func @transform_1(%arg0: i32, %arg1: memref<1xf32, #tpu.memory_space<smem>>) -> (i32, i32) {
    %c0_i32 = arith.constant 0 : i32
    %c0_i32_0 = arith.constant 0 : i32
    %c0_i32_1 = arith.constant 0 : i32
    return %c0_i32, %c0_i32_0 : i32, i32
  }
  func.func @transform_2(%arg0: i32, %arg1: memref<1xf32, #tpu.memory_space<smem>>) -> (i32, i32) {
    %c0_i32 = arith.constant 0 : i32
    %c0_i32_0 = arith.constant 0 : i32
    return %c0_i32, %arg0 : i32, i32
  }
}

</mosaic_0001>

<llo_original>
// kernel: tpu_custom_call.1
$region0: #{tpu_custom_call.1}
  #allocation0 [shape = 'u32[]', space=smem, size = 0x4, offset = 0x4, fixed_abs, tag = 'smem constant byte address 0x4 - core index']
  #allocation1 [shape = 'u32[144,128]{1,0:T(1,128)}', space=vmem, size = 0x12000, scoped, tag = 'internal scratch']
  #allocation2 [shape = 's32[1]{0}', space=sflag, size = 0x4, scoped, tag = 'scoped memory for tpu_custom_call.1']
  #allocation3 [shape = 'f32[1]{0:T(128)S(6)}', space=smem, size = 0x200, scoped, tag = 'prefetched SMEM operand 0']
  %s0 = inlined_call_operand.<no memory space> [shape: f32[1], index: 0, kind: input, shape index: {}]
  %s1 = inlined_call_operand.vmem [shape: f32[1,128], index: 1, kind: input, shape index: {}]
  %s2 = inlined_call_operand.vmem [shape: f32[20,1], index: 2, kind: input, shape index: {}]
  %s3 = inlined_call_operand.hbm [shape: f32[20,128], index: 3, kind: output, shape index: {}]
  %s4 = sld [smem:[#allocation0]]
  $region18: #{tpu_custom_call.1} parent=0
    _
  %s6 = ssub.s32 1, %s4
  %s7 = scalar_select 0, %s6, %s4
  %8 = sst [smem:[#allocation3]] %s0
  $region1: #{tpu_custom_call.1} parent=0
    #allocation4 [shape = 'u8[12288]{0}', space=vmem, size = 0x3000, scoped, tag = 'output window, operand 0, single buffered']
    #allocation5 [shape = 's32[1]{0}', space=sflag, size = 0x4, scoped, tag = 'scoped memory for tpu_custom_call.1']
    %9 = vsyncpa [#allocation5], 0
    // Predicated region
    $region2: #{tpu_custom_call.1} parent=1 // pred_check
      _
    $region3: #{tpu_custom_call.1} parent=1 // pred_check_branch
      %11 = sbr.rel (0) target = $region5
    $region4: #{tpu_custom_call.1} parent=1 // pred_region
      _
    $region5: #{tpu_custom_call.1} parent=1 // pred_fallthru
      _
    // Predicated region
    $region6: #{tpu_custom_call.1} parent=1 // pred_check
      _
    $region7: #{tpu_custom_call.1} parent=1 // pred_check_branch
      %13 = sbr.rel (0) target = $region9
    $region8: #{tpu_custom_call.1} parent=1 // pred_region
      _
    $region9: #{tpu_custom_call.1} parent=1 // pred_fallthru
      _
    %s14 = sld [smem:[#allocation3]]
    %v15 = vld [vmem:[%s1] sm:$0x1]
    %v16 = vld [vmem:[%s2] sm:$0xff]
    %v17 = vld [vmem:[%s2 + $0x8] sm:$0xff]
    %v18 = vld [vmem:[%s2 + $0x10] sm:$0xf]
    %v20 = vlaneseq
    %v21 = vshrl.u32 %v20, 7
    %v22 = vsub.s32 0, %v21
    %v23 = vrot.slane %v15, %v22
    %26 = vset.pattern.permute.xlu0 0
    %27 = vperm.xlu0 %26, %v16
    %v28 = vpop.permute.xlu0 %27
    %31 = vset.pattern.permute.xlu0 0
    %32 = vperm.xlu0 %31, %v17
    %v33 = vpop.permute.xlu0 %32
    %36 = vset.pattern.permute.xlu0 0
    %37 = vperm.xlu0 %36, %v18
    %v38 = vpop.permute.xlu0 %37
    %v40 = vsub.f32 %v23, %v28
    %v41 = vsub.f32 %v23, %v33
    %v42 = vsub.f32 %v23, %v38
    %s43 = ssub.f32 0.0, %s14
    %v44 = vstv %s43
    %v45 = vmul.f32 %v44, %v40
    %v46 = vmul.f32 %v44, %v41
    %v47 = vmul.f32 %v44, %v42
    %v48 = vmul.f32 %v45, %v40
    %v49 = vmul.f32 %v46, %v41
    %v50 = vmul.f32 %v47, %v42
    %v51 = vmul.f32 %v48, 1.442695
    %v52 = vpow.pop %v51
    %v53 = vmul.f32 %v49, 1.442695
    %v54 = vpow.pop %v53
    %v55 = vmul.f32 %v50, 1.442695
    %v56 = vpow.pop %v55
    %57 = vst [vmem:[#allocation4] sm:$0xff] %v52
    %58 = vst [vmem:[#allocation4 + $0x8] sm:$0xff] %v54
    %59 = vst [vmem:[#allocation4 + $0x10] sm:$0xf] %v56
    // Predicated region
    $region10: #{tpu_custom_call.1} parent=1 // pred_check
      _
    $region11: #{tpu_custom_call.1} parent=1 // pred_check_branch
      %61 = sbr.rel (0) target = $region13
    $region12: #{tpu_custom_call.1} parent=1 // pred_region
      %s63 = ssub.s32 384, 384
      %64 = vsyncadd [#allocation5], %s63
      %s65 = sshll.u32 [#allocation4], 4
      %s66 = int_to_ptr.vmem [resolvable:$true] %s65
      %71 = dma.vmem_to_hbm [thread:$0]  %s66, 384, %s3, [#allocation5], 128, 128, 8
    $region13: #{tpu_custom_call.1} parent=1 // pred_fallthru
      _
    // Predicated region
    $region14: #{tpu_custom_call.1} parent=1 // pred_check
      _
    $region15: #{tpu_custom_call.1} parent=1 // pred_check_branch
      %73 = sbr.rel (0) target = $region17
    $region16: #{tpu_custom_call.1} parent=1 // pred_region
      %74 = dma.done [#allocation5], 384
    $region17: #{tpu_custom_call.1} parent=1 // pred_fallthru
      _
    %75 = vsyncpa [#allocation5], 1

</llo_original>
